<compile_context>
chip_gen: v7x
topology: tpu7x:2x2x1
jax: 0.10.0
libtpu: 0.0.40
codegen_flags: <defaults>
</compile_context>

<pallas_src>
import functools

import jax
import jax.numpy as jnp
from jax.experimental import pallas as pl
from jax.experimental.pallas import tpu as pltpu

_LANE = 128   # last-dim (lane) padding for weights / activations / output
_SUB = 16     # second-to-last (sublane) padding; 16 rows = one packed bf16 vreg


def _round_up(n, m):
    return ((n + m - 1) // m) * m


def _cdiv(a, b):
    return (a + b - 1) // b


def _vmem_limit_bytes():
    # ~3/4 of physical VMEM, capped at 100 MiB: ~96 MiB on v5e/v6e (128 MiB), 48 MiB on v7x (64 MiB/TC).
    cap = 128 * 1024 * 1024
    try:
        cap = int(getattr(pltpu.get_tpu_info(), "vmem_capacity_bytes", cap))
    except Exception:
        pass
    return max(32 * 1024 * 1024, min((cap * 3) // 4, 100 * 1024 * 1024))


def _mlp_kernel(x_ref, w1_ref, b1_ref, w2_ref, b2_ref, w3_ref, b3_ref, o_ref):
    # x_ref: (TB, Din) f32;  w*: (K_p, N_p) bf16;  b*: (1, N_p) f32;  o_ref: (TB, Dout_p) bf16.
    # bf16 MXU inputs, f32 accumulation; bias add + ReLU in f32 (v5e VPU is f32-only).
    x = x_ref[...].astype(jnp.bfloat16)
    h = jnp.dot(x, w1_ref[...], preferred_element_type=jnp.float32) + b1_ref[...]
    h = jnp.maximum(h, 0.0).astype(jnp.bfloat16)
    h = jnp.dot(h, w2_ref[...], preferred_element_type=jnp.float32) + b2_ref[...]
    h = jnp.maximum(h, 0.0).astype(jnp.bfloat16)
    out = jnp.dot(h, w3_ref[...], preferred_element_type=jnp.float32) + b3_ref[...]
    o_ref[...] = out.astype(o_ref.dtype)


@functools.partial(jax.jit, static_argnames=("output_dim", "batch_tile"))
def mlp_forward(x, params, *, output_dim, batch_tile=512):
    """x: (B, input_dim) f32.  params: (w1,b1,w2,b2,w3,b3) padded as produced by init_mlp_params."""
    w1, b1, w2, b2, w3, b3 = params
    B, d_in = x.shape
    if d_in != w1.shape[0]:
        raise ValueError(f"input_dim mismatch: x has {d_in}, w1 expects {w1.shape[0]}")
    dout_p = w3.shape[1]

    # Batch tile: multiple of 16 (bf16 sublane packing), capped by batch_tile, and capped so a
    # large batch is split over >= 2 grid steps (keeps both v7x TensorCores busy via "parallel").
    tb = min(batch_tile, _round_up(B, _SUB))
    if B >= 2 * _SUB:
        tb = min(tb, _round_up(_cdiv(B, 2), _SUB))
    tb = _round_up(max(tb, 1), _SUB)
    if tb > B:
        tb = B  # single full-extent block (always a legal block shape)
    grid = (_cdiv(B, tb),)

    # Weights/biases: constant index_map => DMA'd once, VMEM-resident; single-buffered to halve
    # their VMEM footprint (matters most under v7x's 64 MiB per-TC VMEM).
    resident = lambda shape: pl.BlockSpec(shape, lambda i: (0, 0), pipeline_mode=pl.Buffered(1))

    out_p = pl.pallas_call(
        _mlp_kernel,
        out_shape=jax.ShapeDtypeStruct((B, dout_p), jnp.bfloat16),
        grid_spec=pltpu.PrefetchScalarGridSpec(
            num_scalar_prefetch=0,
            grid=grid,
            in_specs=[
                pl.BlockSpec((tb, d_in), lambda i: (i, 0)),   # x streamed per batch tile
                resident(w1.shape), resident(b1.shape),
                resident(w2.shape), resident(b2.shape),
                resident(w3.shape), resident(b3.shape),
            ],
            out_specs=pl.BlockSpec((tb, dout_p), lambda i: (i, 0)),
        ),
        compiler_params=pltpu.CompilerParams(
            dimension_semantics=("parallel",),
            vmem_limit_bytes=_vmem_limit_bytes(),
        ),
    )(x, w1, b1, w2, b2, w3, b3)

    # TODO(synk): if hidden_dim grows so the padded w2 no longer fits resident VMEM (threshold is
    # ~2x lower on v7x than v5e/v6e), add a K/N "arbitrary" reduction grid axis with an f32 VMEM
    # accumulator instead of resident weights; consider 256-lane N/K padding on v6e/v7x then.
    # Keep f32 here if the consumer needs full final-store precision.
    return out_p[:, :output_dim].astype(jnp.float32)


def _orthogonal(key, out_features, in_features):
    # Orthogonal init (nn.init.orthogonal_ semantics), returned in (in, out) kernel layout.
    n = max(out_features, in_features)
    q = jax.random.orthogonal(key, n)            # (n, n)
    w = q[:out_features, :in_features]           # PyTorch layout (out, in)
    return jnp.asarray(w.T, dtype=jnp.float32)   # kernel layout (in, out)


def _pad_weight(w, k_pad, n_pad):
    k, n = w.shape
    return jnp.zeros((k_pad, n_pad), jnp.bfloat16).at[:k, :n].set(w.astype(jnp.bfloat16))


def _pad_bias(b, n_pad):
    return jnp.zeros((1, n_pad), jnp.float32).at[:, : b.shape[-1]].set(b.astype(jnp.float32))


def init_mlp_params(key, input_dim, hidden_dim, output_dim, hidden_depth):
    # TODO(synk): generalize the fused kernel to arbitrary hidden_depth (loop over resident
    # hidden weights); this script builds the hidden_depth=2 variant used in the demo.
    assert hidden_depth == 2, "this script builds the hidden_depth=2 variant"
    hid_p = _round_up(hidden_dim, _LANE)
    out_p = _round_up(output_dim, _LANE)
    k1, k2, k3 = jax.random.split(key, 3)
    # K of layer 1 == input_dim exactly (x is passed unpadded); K of layers 2/3 is padded to the
    # previous layer's 128-padded N so the in-kernel dots line up; zero pads keep results exact.
    w1 = _pad_weight(_orthogonal(k1, hidden_dim, input_dim), input_dim, hid_p)
    b1 = _pad_bias(jnp.zeros((hidden_dim,), jnp.float32), hid_p)
    w2 = _pad_weight(_orthogonal(k2, hidden_dim, hidden_dim), hid_p, hid_p)
    b2 = _pad_bias(jnp.zeros((hidden_dim,), jnp.float32), hid_p)
    w3 = _pad_weight(_orthogonal(k3, output_dim, hidden_dim), hid_p, out_p)
    b3 = _pad_bias(jnp.zeros((output_dim,), jnp.float32), out_p)
    return (w1, b1, w2, b2, w3, b3)


def mlp_reference(x, params, output_dim):
    # Pure-JAX reference matching the kernel's bf16-input / f32-accumulate / bf16-store path.
    w1, b1, w2, b2, w3, b3 = params
    xb = x.astype(jnp.bfloat16)
    h = jnp.dot(xb, w1, preferred_element_type=jnp.float32) + b1
    h = jnp.maximum(h, 0.0).astype(jnp.bfloat16)
    h = jnp.dot(h, w2, preferred_element_type=jnp.float32) + b2
    h = jnp.maximum(h, 0.0).astype(jnp.bfloat16)
    out = jnp.dot(h, w3, preferred_element_type=jnp.float32) + b3
    out = out.astype(jnp.bfloat16)  # mirror the kernel's bf16 output store
    return out[:, :output_dim].astype(jnp.float32)


if __name__ == "__main__":
    key = jax.random.PRNGKey(0)
    kx, kx2, kp = jax.random.split(key, 3)

    batch, input_dim, hidden_dim, output_dim, hidden_depth = 8, 16, 32, 8, 2
    params = init_mlp_params(kp, input_dim, hidden_dim, output_dim, hidden_depth)

    # Case 1: tiny single-tile batch (full-extent block).
    x = jax.random.normal(kx, (batch, input_dim), dtype=jnp.float32)
    out = mlp_forward(x, params, output_dim=output_dim)
    jax.block_until_ready(out)
    ref = mlp_reference(x, params, output_dim)
    assert out.shape == (batch, output_dim)
    assert jnp.allclose(out, ref, atol=2e-2, rtol=2e-2), float(jnp.abs(out - ref).max())

    # Case 2: multi-step grid with a partial last batch block (exercises cdiv grid + masking).
    batch2 = 20
    x2 = jax.random.normal(kx2, (batch2, input_dim), dtype=jnp.float32)
    out2 = mlp_forward(x2, params, output_dim=output_dim, batch_tile=8)
    jax.block_until_ready(out2)
    ref2 = mlp_reference(x2, params, output_dim)
    assert out2.shape == (batch2, output_dim)
    assert jnp.allclose(out2, ref2, atol=2e-2, rtol=2e-2), float(jnp.abs(out2 - ref2).max())

    print("KERNEL_OK")
</pallas_src>

<mosaic_0001>
module attributes {stable_mosaic.version = 11 : i64} {
  func.func @_mlp_kernel(%arg0: i32, %arg1: memref<8x16xf32, #tpu.memory_space<vmem>>, %arg2: memref<16x128xbf16, #tpu.memory_space<vmem>>, %arg3: memref<1x128xf32, #tpu.memory_space<vmem>>, %arg4: memref<128x128xbf16, #tpu.memory_space<vmem>>, %arg5: memref<1x128xf32, #tpu.memory_space<vmem>>, %arg6: memref<128x128xbf16, #tpu.memory_space<vmem>>, %arg7: memref<1x128xf32, #tpu.memory_space<vmem>>, %arg8: memref<8x128xbf16, #tpu.memory_space<vmem>>) attributes {dimension_semantics = [#tpu.dimension_semantics<parallel>], iteration_bounds = array<i64: 1>, scalar_prefetch = 0 : i64, scratch_operands = 0 : i64, tpu.core_type = #tpu.core_type<tc>, window_params = [{transform_indices = @transform_0, window_bounds = array<i64: 8, 16>}, {pipeline_mode = #tpu.pipeline_mode<synchronous>, transform_indices = @transform_1, window_bounds = array<i64: 16, 128>}, {pipeline_mode = #tpu.pipeline_mode<synchronous>, transform_indices = @transform_2, window_bounds = array<i64: 1, 128>}, {pipeline_mode = #tpu.pipeline_mode<synchronous>, transform_indices = @transform_3, window_bounds = array<i64: 128, 128>}, {pipeline_mode = #tpu.pipeline_mode<synchronous>, transform_indices = @transform_4, window_bounds = array<i64: 1, 128>}, {pipeline_mode = #tpu.pipeline_mode<synchronous>, transform_indices = @transform_5, window_bounds = array<i64: 128, 128>}, {pipeline_mode = #tpu.pipeline_mode<synchronous>, transform_indices = @transform_6, window_bounds = array<i64: 1, 128>}, {transform_indices = @transform_7, window_bounds = array<i64: 8, 128>}]} {
    %c0 = arith.constant 0 : index
    %c0_0 = arith.constant 0 : index
    %0 = vector.load %arg1[%c0, %c0_0] : memref<8x16xf32, #tpu.memory_space<vmem>>, vector<8x16xf32>
    %1 = arith.truncf %0 : vector<8x16xf32> to vector<8x16xbf16>
    %c0_1 = arith.constant 0 : index
    %c0_2 = arith.constant 0 : index
    %2 = vector.load %arg2[%c0_1, %c0_2] : memref<16x128xbf16, #tpu.memory_space<vmem>>, vector<16x128xbf16>
    %cst = arith.constant dense<0.000000e+00> : vector<8x128xf32>
    %3 = tpu.matmul %1, %2, %cst {dimension_numbers = #tpu.dot_dimension_numbers<[1], [0], [0], [1], [0, 0, 1, 1], [], []>} : vector<8x16xbf16>, vector<16x128xbf16>, vector<8x128xf32> -> vector<8x128xf32>
    %c0_3 = arith.constant 0 : index
    %c0_4 = arith.constant 0 : index
    %4 = vector.load %arg3[%c0_3, %c0_4] : memref<1x128xf32, #tpu.memory_space<vmem>>, vector<1x128xf32>
    %5 = vector.broadcast %4 : vector<1x128xf32> to vector<8x128xf32>
    %6 = arith.addf %3, %5 : vector<8x128xf32>
    %cst_5 = arith.constant 0.000000e+00 : f32
    %7 = vector.broadcast %cst_5 : f32 to vector<8x128xf32>
    %8 = arith.maximumf %6, %7 : vector<8x128xf32>
    %9 = arith.truncf %8 : vector<8x128xf32> to vector<8x128xbf16>
    %c0_6 = arith.constant 0 : index
    %c0_7 = arith.constant 0 : index
    %10 = vector.load %arg4[%c0_6, %c0_7] : memref<128x128xbf16, #tpu.memory_space<vmem>>, vector<128x128xbf16>
    %cst_8 = arith.constant dense<0.000000e+00> : vector<8x128xf32>
    %11 = tpu.matmul %9, %10, %cst_8 {dimension_numbers = #tpu.dot_dimension_numbers<[1], [0], [0], [1], [0, 0, 1, 1], [], []>} : vector<8x128xbf16>, vector<128x128xbf16>, vector<8x128xf32> -> vector<8x128xf32>
    %c0_9 = arith.constant 0 : index
    %c0_10 = arith.constant 0 : index
    %12 = vector.load %arg5[%c0_9, %c0_10] : memref<1x128xf32, #tpu.memory_space<vmem>>, vector<1x128xf32>
    %13 = vector.broadcast %12 : vector<1x128xf32> to vector<8x128xf32>
    %14 = arith.addf %11, %13 : vector<8x128xf32>
    %cst_11 = arith.constant 0.000000e+00 : f32
    %15 = vector.broadcast %cst_11 : f32 to vector<8x128xf32>
    %16 = arith.maximumf %14, %15 : vector<8x128xf32>
    %17 = arith.truncf %16 : vector<8x128xf32> to vector<8x128xbf16>
    %c0_12 = arith.constant 0 : index
    %c0_13 = arith.constant 0 : index
    %18 = vector.load %arg6[%c0_12, %c0_13] : memref<128x128xbf16, #tpu.memory_space<vmem>>, vector<128x128xbf16>
    %cst_14 = arith.constant dense<0.000000e+00> : vector<8x128xf32>
    %19 = tpu.matmul %17, %18, %cst_14 {dimension_numbers = #tpu.dot_dimension_numbers<[1], [0], [0], [1], [0, 0, 1, 1], [], []>} : vector<8x128xbf16>, vector<128x128xbf16>, vector<8x128xf32> -> vector<8x128xf32>
    %c0_15 = arith.constant 0 : index
    %c0_16 = arith.constant 0 : index
    %20 = vector.load %arg7[%c0_15, %c0_16] : memref<1x128xf32, #tpu.memory_space<vmem>>, vector<1x128xf32>
    %21 = vector.broadcast %20 : vector<1x128xf32> to vector<8x128xf32>
    %22 = arith.addf %19, %21 : vector<8x128xf32>
    %23 = arith.truncf %22 : vector<8x128xf32> to vector<8x128xbf16>
    %c0_17 = arith.constant 0 : index
    %c0_18 = arith.constant 0 : index
    %24 = vector.load %arg8[%c0_17, %c0_18] : memref<8x128xbf16, #tpu.memory_space<vmem>>, vector<8x128xbf16>
    tpu.vector_store %arg8[%c0_17, %c0_18], %23 {strides = array<i32>} : memref<8x128xbf16, #tpu.memory_space<vmem>>, vector<8x128xbf16>,
    return
  }
  func.func @transform_0(%arg0: i32) -> (i32, i32) {
    %c0_i32 = arith.constant 0 : i32
    %c0_i32_0 = arith.constant 0 : i32
    return %arg0, %c0_i32 : i32, i32
  }
  func.func @transform_1(%arg0: i32) -> (i32, i32) {
    %c0_i32 = arith.constant 0 : i32
    %c0_i32_0 = arith.constant 0 : i32
    %c0_i32_1 = arith.constant 0 : i32
    return %c0_i32, %c0_i32_0 : i32, i32
  }
  func.func @transform_2(%arg0: i32) -> (i32, i32) {
    %c0_i32 = arith.constant 0 : i32
    %c0_i32_0 = arith.constant 0 : i32
    %c0_i32_1 = arith.constant 0 : i32
    return %c0_i32, %c0_i32_0 : i32, i32
  }
  func.func @transform_3(%arg0: i32) -> (i32, i32) {
    %c0_i32 = arith.constant 0 : i32
    %c0_i32_0 = arith.constant 0 : i32
    %c0_i32_1 = arith.constant 0 : i32
    return %c0_i32, %c0_i32_0 : i32, i32
  }
  func.func @transform_4(%arg0: i32) -> (i32, i32) {
    %c0_i32 = arith.constant 0 : i32
    %c0_i32_0 = arith.constant 0 : i32
    %c0_i32_1 = arith.constant 0 : i32
    return %c0_i32, %c0_i32_0 : i32, i32
  }
  func.func @transform_5(%arg0: i32) -> (i32, i32) {
    %c0_i32 = arith.constant 0 : i32
    %c0_i32_0 = arith.constant 0 : i32
    %c0_i32_1 = arith.constant 0 : i32
    return %c0_i32, %c0_i32_0 : i32, i32
  }
  func.func @transform_6(%arg0: i32) -> (i32, i32) {
    %c0_i32 = arith.constant 0 : i32
    %c0_i32_0 = arith.constant 0 : i32
    %c0_i32_1 = arith.constant 0 : i32
    return %c0_i32, %c0_i32_0 : i32, i32
  }
  func.func @transform_7(%arg0: i32) -> (i32, i32) {
    %c0_i32 = arith.constant 0 : i32
    %c0_i32_0 = arith.constant 0 : i32
    return %arg0, %c0_i32 : i32, i32
  }
}

</mosaic_0001>

<llo_original>
// kernel: mlp_forward.1
$region0: #{mlp_forward.1}
  #allocation0 [shape = 'u32[]', space=smem, size = 0x4, offset = 0x4, fixed_abs, tag = 'smem constant byte address 0x4 - core index']
  #allocation1 [shape = 'u32[144,128]{1,0:T(1,128)}', space=vmem, size = 0x12000, scoped, tag = 'internal scratch']
  %s0 = inlined_call_operand.hbm [shape: f32[8,16], index: 0, kind: input, shape index: {}]
  %s1 = inlined_call_operand.hbm [shape: bf16[16,128], index: 1, kind: input, shape index: {}]
  %s2 = inlined_call_operand.hbm [shape: f32[1,128], index: 2, kind: input, shape index: {}]
  %s3 = inlined_call_operand.hbm [shape: bf16[128,128], index: 3, kind: input, shape index: {}]
  %s4 = inlined_call_operand.hbm [shape: f32[1,128], index: 4, kind: input, shape index: {}]
  %s5 = inlined_call_operand.hbm [shape: bf16[128,128], index: 5, kind: input, shape index: {}]
  %s6 = inlined_call_operand.hbm [shape: f32[1,128], index: 6, kind: input, shape index: {}]
  %s7 = inlined_call_operand.hbm [shape: bf16[8,128], index: 7, kind: output, shape index: {}]
  %s8 = sld [smem:[#allocation0]]
  $region66: #{mlp_forward.1} parent=0
    _
  %s10 = ssub.s32 1, %s8
  %s11 = scalar_select 0, %s10, %s8
  $region1: #{mlp_forward.1} parent=0
    #allocation2 [shape = 'u8[4096]{0}', space=vmem, size = 0x1000, scoped, tag = 'input window, operand 0, single buffered']
    #allocation3 [shape = 's32[1]{0}', space=sflag, size = 0x4, scoped, tag = 'scoped memory for mlp_forward.1']
    #allocation4 [shape = 's32[1]{0}', space=sflag, size = 0x4, scoped, tag = 'scoped memory for mlp_forward.1']
    #allocation5 [shape = 'u8[4096]{0}', space=vmem, size = 0x1000, scoped, tag = 'input window, operand 1, single buffered']
    #allocation6 [shape = 's32[1]{0}', space=sflag, size = 0x4, scoped, tag = 'scoped memory for mlp_forward.1']
    #allocation7 [shape = 'u8[512]{0}', space=vmem, size = 0x400, scoped, tag = 'input window, operand 2, single buffered']
    #allocation8 [shape = 'u8[32768]{0}', space=vmem, size = 0x8000, scoped, tag = 'input window, operand 3, single buffered']
    #allocation9 [shape = 's32[1]{0}', space=sflag, size = 0x4, scoped, tag = 'scoped memory for mlp_forward.1']
    #allocation10 [shape = 'u8[512]{0}', space=vmem, size = 0x400, scoped, tag = 'input window, operand 4, single buffered']
    #allocation11 [shape = 'u8[32768]{0}', space=vmem, size = 0x8000, scoped, tag = 'input window, operand 5, single buffered']
    #allocation12 [shape = 's32[1]{0}', space=sflag, size = 0x4, scoped, tag = 'scoped memory for mlp_forward.1']
    #allocation13 [shape = 'u8[512]{0}', space=vmem, size = 0x400, scoped, tag = 'input window, operand 6, single buffered']
    #allocation14 [shape = 'u8[2048]{0}', space=vmem, size = 0x800, scoped, tag = 'output window, operand 0, single buffered']
    %12 = vsyncpa [#allocation3], 0
    %13 = vsyncpa [#allocation6], 0
    %14 = vsyncpa [#allocation9], 0
    %15 = vsyncpa [#allocation12], 0
    %16 = vsyncpa [#allocation4], 0
    // Predicated region
    $region2: #{mlp_forward.1} parent=1 // pred_check
      _
    $region3: #{mlp_forward.1} parent=1 // pred_check_branch
      %18 = sbr.rel (0) target = $region5
    $region4: #{mlp_forward.1} parent=1 // pred_region
      %s20 = ssub.s32 128, 128
      %21 = vsyncadd [#allocation3], %s20
      %s23 = sshll.u32 [#allocation2], 4
      %s24 = int_to_ptr.vmem [resolvable:$true] %s23
      %26 = dma.hbm_to_vmem [thread:$0]  %s0, 128, %s24, [#allocation3]
    $region5: #{mlp_forward.1} parent=1 // pred_fallthru
      _
    // Predicated region
    $region6: #{mlp_forward.1} parent=1 // pred_check
      _
    $region7: #{mlp_forward.1} parent=1 // pred_check_branch
      %28 = sbr.rel (0) target = $region9
    $region8: #{mlp_forward.1} parent=1 // pred_region
      %s30 = ssub.s32 128, 128
      %31 = vsyncadd [#allocation6], %s30
      %s32 = sshll.u32 [#allocation5], 4
      %s33 = int_to_ptr.vmem [resolvable:$true] %s32
      %38 = dma.hbm_to_vmem [thread:$0]  %s1, 128, %s33, [#allocation6], 64, 64, 4
    $region9: #{mlp_forward.1} parent=1 // pred_fallthru
      _
    // Predicated region
    $region10: #{mlp_forward.1} parent=1 // pred_check
      _
    $region11: #{mlp_forward.1} parent=1 // pred_check_branch
      %40 = sbr.rel (0) target = $region13
    $region12: #{mlp_forward.1} parent=1 // pred_region
      %s42 = ssub.s32 16, 16
      %43 = vsyncadd [#allocation6], %s42
      %s45 = sshll.u32 [#allocation7], 4
      %s46 = int_to_ptr.vmem [resolvable:$true] %s45
      %48 = dma.hbm_to_vmem [thread:$0]  %s2, 16, %s46, [#allocation6]
    $region13: #{mlp_forward.1} parent=1 // pred_fallthru
      _
    // Predicated region
    $region14: #{mlp_forward.1} parent=1 // pred_check
      _
    $region15: #{mlp_forward.1} parent=1 // pred_check_branch
      %50 = sbr.rel (0) target = $region17
    $region16: #{mlp_forward.1} parent=1 // pred_region
      %s52 = ssub.s32 1024, 1024
      %53 = vsyncadd [#allocation9], %s52
      %s54 = sshll.u32 [#allocation8], 4
      %s55 = int_to_ptr.vmem [resolvable:$true] %s54
      %60 = dma.hbm_to_vmem [thread:$0]  %s3, 1024, %s55, [#allocation9], 64, 64, 4
    $region17: #{mlp_forward.1} parent=1 // pred_fallthru
      _
    // Predicated region
    $region18: #{mlp_forward.1} parent=1 // pred_check
      _
    $region19: #{mlp_forward.1} parent=1 // pred_check_branch
      %62 = sbr.rel (0) target = $region21
    $region20: #{mlp_forward.1} parent=1 // pred_region
      %s64 = ssub.s32 16, 16
      %65 = vsyncadd [#allocation9], %s64
      %s67 = sshll.u32 [#allocation10], 4
      %s68 = int_to_ptr.vmem [resolvable:$true] %s67
      %70 = dma.hbm_to_vmem [thread:$0]  %s4, 16, %s68, [#allocation9]
    $region21: #{mlp_forward.1} parent=1 // pred_fallthru
      _
    // Predicated region
    $region22: #{mlp_forward.1} parent=1 // pred_check
      _
    $region23: #{mlp_forward.1} parent=1 // pred_check_branch
      %72 = sbr.rel (0) target = $region25
    $region24: #{mlp_forward.1} parent=1 // pred_region
      %s74 = ssub.s32 1024, 1024
      %75 = vsyncadd [#allocation12], %s74
      %s76 = sshll.u32 [#allocation11], 4
      %s77 = int_to_ptr.vmem [resolvable:$true] %s76
      %82 = dma.hbm_to_vmem [thread:$0]  %s5, 1024, %s77, [#allocation12], 64, 64, 4
    $region25: #{mlp_forward.1} parent=1 // pred_fallthru
      _
    // Predicated region
    $region26: #{mlp_forward.1} parent=1 // pred_check
      _
    $region27: #{mlp_forward.1} parent=1 // pred_check_branch
      %84 = sbr.rel (0) target = $region29
    $region28: #{mlp_forward.1} parent=1 // pred_region
      %s86 = ssub.s32 16, 16
      %87 = vsyncadd [#allocation12], %s86
      %s89 = sshll.u32 [#allocation13], 4
      %s90 = int_to_ptr.vmem [resolvable:$true] %s89
      %92 = dma.hbm_to_vmem [thread:$0]  %s6, 16, %s90, [#allocation12]
    $region29: #{mlp_forward.1} parent=1 // pred_fallthru
      _
    // Predicated region
    $region30: #{mlp_forward.1} parent=1 // pred_check
      _
    $region31: #{mlp_forward.1} parent=1 // pred_check_branch
      %94 = sbr.rel (0) target = $region33
    $region32: #{mlp_forward.1} parent=1 // pred_region
      %95 = dma.done [#allocation3], 128
    $region33: #{mlp_forward.1} parent=1 // pred_fallthru
      _
    // Predicated region
    $region34: #{mlp_forward.1} parent=1 // pred_check
      _
    $region35: #{mlp_forward.1} parent=1 // pred_check_branch
      %97 = sbr.rel (0) target = $region37
    $region36: #{mlp_forward.1} parent=1 // pred_region
      %98 = dma.done [#allocation6], 128
    $region37: #{mlp_forward.1} parent=1 // pred_fallthru
      _
    // Predicated region
    $region38: #{mlp_forward.1} parent=1 // pred_check
      _
    $region39: #{mlp_forward.1} parent=1 // pred_check_branch
      %100 = sbr.rel (0) target = $region41
    $region40: #{mlp_forward.1} parent=1 // pred_region
      %101 = dma.done [#allocation6], 16
    $region41: #{mlp_forward.1} parent=1 // pred_fallthru
      _
    // Predicated region
    $region42: #{mlp_forward.1} parent=1 // pred_check
      _
    $region43: #{mlp_forward.1} parent=1 // pred_check_branch
      %103 = sbr.rel (0) target = $region45
    $region44: #{mlp_forward.1} parent=1 // pred_region
      %104 = dma.done [#allocation9], 1024
    $region45: #{mlp_forward.1} parent=1 // pred_fallthru
      _
    // Predicated region
    $region46: #{mlp_forward.1} parent=1 // pred_check
      _
    $region47: #{mlp_forward.1} parent=1 // pred_check_branch
      %106 = sbr.rel (0) target = $region49
    $region48: #{mlp_forward.1} parent=1 // pred_region
      %107 = dma.done [#allocation9], 16
    $region49: #{mlp_forward.1} parent=1 // pred_fallthru
      _
    // Predicated region
    $region50: #{mlp_forward.1} parent=1 // pred_check
      _
    $region51: #{mlp_forward.1} parent=1 // pred_check_branch
      %109 = sbr.rel (0) target = $region53
    $region52: #{mlp_forward.1} parent=1 // pred_region
      %110 = dma.done [#allocation12], 1024
    $region53: #{mlp_forward.1} parent=1 // pred_fallthru
      _
    // Predicated region
    $region54: #{mlp_forward.1} parent=1 // pred_check
      _
    $region55: #{mlp_forward.1} parent=1 // pred_check_branch
      %112 = sbr.rel (0) target = $region57
    $region56: #{mlp_forward.1} parent=1 // pred_region
      %113 = dma.done [#allocation12], 16
    $region57: #{mlp_forward.1} parent=1 // pred_fallthru
      _
    %v115 = vld [vmem:[#allocation2] sm:$0xff]
    %v116 = vpack.c.bf16 %v115, %v115
    %v117 = vld [vmem:[#allocation5] sm:$0xf]
    %v118 = vld [vmem:[#allocation5 + $0x4] sm:$0xf]
    %v119 = vld [vmem:[#allocation7] sm:$0x1]
    %v121 = vlaneseq
    %v122 = vshrl.u32 %v121, 7
    %v123 = vsub.s32 0, %v122
    %v124 = vrot.slane %v119, %v123
    %v128 = vunpack.c.l.b16 %v117
    %v129 = vunpack.c.l.b16 %v118
    %v130 = vpack.c.b16 %v129, %v128
    %vm132 = vcmask 130048
    %v134 = vsel %vm132, %v116, 0
    %136 = vmatprep.subr.bf16.mxu0 0
    %137 = vmatpush1.bf16.msra.mxu0 %v130
    %138 = vmatprep.subr.bf16.mxu0 0
    %139 = vmatpush1.bf16.msra.mxu0 0
    %140 = vmatprep.subr.bf16.mxu0 0
    %141 = vmatpush1.bf16.msra.mxu0 0
    %142 = vmatprep.subr.bf16.mxu0 0
    %143 = vmatpush1.bf16.msra.mxu0 0
    %144 = vmatprep.subr.bf16.mxu0 0
    %145 = vmatpush1.bf16.msra.mxu0 0
    %146 = vmatprep.subr.bf16.mxu0 0
    %147 = vmatpush1.bf16.msra.mxu0 0
    %148 = vmatprep.subr.bf16.mxu0 0
    %149 = vmatpush1.bf16.msra.mxu0 0
    %150 = vmatprep.subr.bf16.mxu0 0
    %151 = vmatpush1.bf16.msra.mxu0 0
    %152 = vmatprep.subr.bf16.mxu0 0
    %153 = vmatpush1.bf16.msra.mxu0 0
    %154 = vmatprep.subr.bf16.mxu0 0
    %155 = vmatpush1.bf16.msra.mxu0 0
    %156 = vmatprep.subr.bf16.mxu0 0
    %157 = vmatpush1.bf16.msra.mxu0 0
    %158 = vmatprep.subr.bf16.mxu0 0
    %159 = vmatpush1.bf16.msra.mxu0 0
    %160 = vmatprep.subr.bf16.mxu0 0
    %161 = vmatpush1.bf16.msra.mxu0 0
    %162 = vmatprep.subr.bf16.mxu0 0
    %163 = vmatpush1.bf16.msra.mxu0 0
    %164 = vmatprep.subr.bf16.mxu0 0
    %165 = vmatpush1.bf16.msra.mxu0 0
    %166 = vmatprep.subr.bf16.mxu0 0
    %167 = vmatpush1.bf16.msra.mxu0 0
    %168 = vmatprep.mubr.bf16.mxu0 0
    %169 = vmatmul.mubr.bf16.gmra.mrb[0].mxu0 %v134
    %v170 = vpop.f32.mrb[0].mxu0
    %v171 = vadd.f32 %v124, %v170
    %v172 = vpop.f32.mrb[0].mxu0
    %v173 = vpop.f32.mrb[0].mxu0
    %v174 = vpop.f32.mrb[0].mxu0
    %175 = vdwg.mxu0
    %v176 = vmax.f32 %v171, 0.0
    %v177 = vpack.c.bf16 %v176, %v176
    %v178 = vld [vmem:[#allocation8] sm:$0xf]
    %v179 = vld [vmem:[#allocation8 + $0x4] sm:$0xf]
    %v180 = vld [vmem:[#allocation8 + $0x8] sm:$0xf]
    %v181 = vld [vmem:[#allocation8 + $0xc] sm:$0xf]
    %v182 = vld [vmem:[#allocation8 + $0x10] sm:$0xf]
    %v183 = vld [vmem:[#allocation8 + $0x14] sm:$0xf]
    %v184 = vld [vmem:[#allocation8 + $0x18] sm:$0xf]
    %v185 = vld [vmem:[#allocation8 + $0x1c] sm:$0xf]
    %v186 = vld [vmem:[#allocation8 + $0x20] sm:$0xf]
    %v187 = vld [vmem:[#allocation8 + $0x24] sm:$0xf]
    %v188 = vld [vmem:[#allocation8 + $0x28] sm:$0xf]
    %v189 = vld [vmem:[#allocation8 + $0x2c] sm:$0xf]
    %v190 = vld [vmem:[#allocation8 + $0x30] sm:$0xf]
    %v191 = vld [vmem:[#allocation8 + $0x34] sm:$0xf]
    %v192 = vld [vmem:[#allocation8 + $0x38] sm:$0xf]
    %v193 = vld [vmem:[#allocation8 + $0x3c] sm:$0xf]
    %v194 = vld [vmem:[#allocation10] sm:$0x1]
    %v196 = vlaneseq
    %v197 = vshrl.u32 %v196, 7
    %v198 = vsub.s32 0, %v197
    %v199 = vrot.slane %v194, %v198
    %v217 = vunpack.c.l.b16 %v178
    %v218 = vunpack.c.l.b16 %v179
    %v219 = vunpack.c.l.b16 %v180
    %v220 = vunpack.c.l.b16 %v181
    %v221 = vunpack.c.l.b16 %v182
    %v222 = vunpack.c.l.b16 %v183
    %v223 = vunpack.c.l.b16 %v184
    %v224 = vunpack.c.l.b16 %v185
    %v225 = vunpack.c.l.b16 %v186
    %v226 = vunpack.c.l.b16 %v187
    %v227 = vunpack.c.l.b16 %v188
    %v228 = vunpack.c.l.b16 %v189
    %v229 = vunpack.c.l.b16 %v190
    %v230 = vunpack.c.l.b16 %v191
    %v231 = vunpack.c.l.b16 %v192
    %v232 = vunpack.c.l.b16 %v193
    %v233 = vpack.c.b16 %v218, %v217
    %v234 = vpack.c.b16 %v220, %v219
    %v235 = vpack.c.b16 %v222, %v221
    %v236 = vpack.c.b16 %v224, %v223
    %v237 = vpack.c.b16 %v226, %v225
    %v238 = vpack.c.b16 %v228, %v227
    %v239 = vpack.c.b16 %v230, %v229
    %v240 = vpack.c.b16 %v232, %v231
    %249 = vmatprep.subr.bf16.mxu0 0
    %250 = vmatpush1.bf16.msra.mxu0 %v233
    %251 = vmatprep.subr.bf16.mxu0 0
    %252 = vmatpush1.bf16.msra.mxu0 %v234
    %253 = vmatprep.subr.bf16.mxu0 0
    %254 = vmatpush1.bf16.msra.mxu0 %v235
    %255 = vmatprep.subr.bf16.mxu0 0
    %256 = vmatpush1.bf16.msra.mxu0 %v236
    %257 = vmatprep.subr.bf16.mxu0 0
    %258 = vmatpush1.bf16.msra.mxu0 %v237
    %259 = vmatprep.subr.bf16.mxu0 0
    %260 = vmatpush1.bf16.msra.mxu0 %v238
    %261 = vmatprep.subr.bf16.mxu0 0
    %262 = vmatpush1.bf16.msra.mxu0 %v239
    %263 = vmatprep.subr.bf16.mxu0 0
    %264 = vmatpush1.bf16.msra.mxu0 %v240
    %265 = vmatprep.subr.bf16.mxu0 0
    %266 = vmatpush1.bf16.msra.mxu0 0
    %267 = vmatprep.subr.bf16.mxu0 0
    %268 = vmatpush1.bf16.msra.mxu0 0
    %269 = vmatprep.subr.bf16.mxu0 0
    %270 = vmatpush1.bf16.msra.mxu0 0
    %271 = vmatprep.subr.bf16.mxu0 0
    %272 = vmatpush1.bf16.msra.mxu0 0
    %273 = vmatprep.subr.bf16.mxu0 0
    %274 = vmatpush1.bf16.msra.mxu0 0
    %275 = vmatprep.subr.bf16.mxu0 0
    %276 = vmatpush1.bf16.msra.mxu0 0
    %277 = vmatprep.subr.bf16.mxu0 0
    %278 = vmatpush1.bf16.msra.mxu0 0
    %279 = vmatprep.subr.bf16.mxu0 0
    %280 = vmatpush1.bf16.msra.mxu0 0
    %281 = vmatprep.mubr.bf16.mxu0 0
    %282 = vmatmul.mubr.bf16.gmra.mrb[0].mxu0 %v177
    %v283 = vpop.f32.mrb[0].mxu0
    %v284 = vadd.f32 %v199, %v283
    %v285 = vpop.f32.mrb[0].mxu0
    %v286 = vpop.f32.mrb[0].mxu0
    %v287 = vpop.f32.mrb[0].mxu0
    %288 = vdwg.mxu0
    %v289 = vmax.f32 %v284, 0.0
    %v290 = vpack.c.bf16 %v289, %v289
    %v291 = vld [vmem:[#allocation11] sm:$0xf]
    %v292 = vld [vmem:[#allocation11 + $0x4] sm:$0xf]
    %v293 = vld [vmem:[#allocation11 + $0x8] sm:$0xf]
    %v294 = vld [vmem:[#allocation11 + $0xc] sm:$0xf]
    %v295 = vld [vmem:[#allocation11 + $0x10] sm:$0xf]
    %v296 = vld [vmem:[#allocation11 + $0x14] sm:$0xf]
    %v297 = vld [vmem:[#allocation11 + $0x18] sm:$0xf]
    %v298 = vld [vmem:[#allocation11 + $0x1c] sm:$0xf]
    %v299 = vld [vmem:[#allocation11 + $0x20] sm:$0xf]
    %v300 = vld [vmem:[#allocation11 + $0x24] sm:$0xf]
    %v301 = vld [vmem:[#allocation11 + $0x28] sm:$0xf]
    %v302 = vld [vmem:[#allocation11 + $0x2c] sm:$0xf]
    %v303 = vld [vmem:[#allocation11 + $0x30] sm:$0xf]
    %v304 = vld [vmem:[#allocation11 + $0x34] sm:$0xf]
    %v305 = vld [vmem:[#allocation11 + $0x38] sm:$0xf]
    %v306 = vld [vmem:[#allocation11 + $0x3c] sm:$0xf]
    %v307 = vld [vmem:[#allocation13] sm:$0x1]
    %v309 = vlaneseq
    %v310 = vshrl.u32 %v309, 7
    %v311 = vsub.s32 0, %v310
    %v312 = vrot.slane %v307, %v311
    %v330 = vunpack.c.l.b16 %v291
    %v331 = vunpack.c.l.b16 %v292
    %v332 = vunpack.c.l.b16 %v293
    %v333 = vunpack.c.l.b16 %v294
    %v334 = vunpack.c.l.b16 %v295
    %v335 = vunpack.c.l.b16 %v296
    %v336 = vunpack.c.l.b16 %v297
    %v337 = vunpack.c.l.b16 %v298
    %v338 = vunpack.c.l.b16 %v299
    %v339 = vunpack.c.l.b16 %v300
    %v340 = vunpack.c.l.b16 %v301
    %v341 = vunpack.c.l.b16 %v302
    %v342 = vunpack.c.l.b16 %v303
    %v343 = vunpack.c.l.b16 %v304
    %v344 = vunpack.c.l.b16 %v305
    %v345 = vunpack.c.l.b16 %v306
    %v346 = vpack.c.b16 %v331, %v330
    %v347 = vpack.c.b16 %v333, %v332
    %v348 = vpack.c.b16 %v335, %v334
    %v349 = vpack.c.b16 %v337, %v336
    %v350 = vpack.c.b16 %v339, %v338
    %v351 = vpack.c.b16 %v341, %v340
    %v352 = vpack.c.b16 %v343, %v342
    %v353 = vpack.c.b16 %v345, %v344
    %362 = vmatprep.subr.bf16.mxu0 0
    %363 = vmatpush1.bf16.msra.mxu0 %v346
    %364 = vmatprep.subr.bf16.mxu0 0
    %365 = vmatpush1.bf16.msra.mxu0 %v347
    %366 = vmatprep.subr.bf16.mxu0 0
    %367 = vmatpush1.bf16.msra.mxu0 %v348
    %368 = vmatprep.subr.bf16.mxu0 0
    %369 = vmatpush1.bf16.msra.mxu0 %v349
    %370 = vmatprep.subr.bf16.mxu0 0
    %371 = vmatpush1.bf16.msra.mxu0 %v350
    %372 = vmatprep.subr.bf16.mxu0 0
    %373 = vmatpush1.bf16.msra.mxu0 %v351
    %374 = vmatprep.subr.bf16.mxu0 0
    %375 = vmatpush1.bf16.msra.mxu0 %v352
    %376 = vmatprep.subr.bf16.mxu0 0
    %377 = vmatpush1.bf16.msra.mxu0 %v353
    %378 = vmatprep.subr.bf16.mxu0 0
    %379 = vmatpush1.bf16.msra.mxu0 0
    %380 = vmatprep.subr.bf16.mxu0 0
    %381 = vmatpush1.bf16.msra.mxu0 0
    %382 = vmatprep.subr.bf16.mxu0 0
    %383 = vmatpush1.bf16.msra.mxu0 0
    %384 = vmatprep.subr.bf16.mxu0 0
    %385 = vmatpush1.bf16.msra.mxu0 0
    %386 = vmatprep.subr.bf16.mxu0 0
    %387 = vmatpush1.bf16.msra.mxu0 0
    %388 = vmatprep.subr.bf16.mxu0 0
    %389 = vmatpush1.bf16.msra.mxu0 0
    %390 = vmatprep.subr.bf16.mxu0 0
    %391 = vmatpush1.bf16.msra.mxu0 0
    %392 = vmatprep.subr.bf16.mxu0 0
    %393 = vmatpush1.bf16.msra.mxu0 0
    %394 = vmatprep.mubr.bf16.mxu0 0
    %395 = vmatmul.mubr.bf16.gmra.mrb[0].mxu0 %v290
    %v396 = vpop.f32.mrb[0].mxu0
    %v397 = vadd.f32 %v312, %v396
    %v398 = vpop.f32.mrb[0].mxu0
    %v399 = vpop.f32.mrb[0].mxu0
    %v400 = vpop.f32.mrb[0].mxu0
    %401 = vdwg.mxu0
    %v402 = vpack.c.bf16 %v397, %v397
    %403 = vst [vmem:[#allocation14] sm:$0xf] %v402
    // Predicated region
    $region58: #{mlp_forward.1} parent=1 // pred_check
      _
    $region59: #{mlp_forward.1} parent=1 // pred_check_branch
      %405 = sbr.rel (0) target = $region61
    $region60: #{mlp_forward.1} parent=1 // pred_region
      %s407 = ssub.s32 64, 64
      %408 = vsyncadd [#allocation4], %s407
      %s410 = sshll.u32 [#allocation14], 4
      %s411 = int_to_ptr.vmem [resolvable:$true] %s410
      %413 = dma.vmem_to_hbm [thread:$0]  %s411, 64, %s7, [#allocation4]
    $region61: #{mlp_forward.1} parent=1 // pred_fallthru
      _
    // Predicated region
    $region62: #{mlp_forward.1} parent=1 // pred_check
      _
    $region63: #{mlp_forward.1} parent=1 // pred_check_branch
      %415 = sbr.rel (0) target = $region65
    $region64: #{mlp_forward.1} parent=1 // pred_region
      %416 = dma.done [#allocation4], 64
    $region65: #{mlp_forward.1} parent=1 // pred_fallthru
      _
    %417 = vsyncpa [#allocation3], 1
    %418 = vsyncpa [#allocation6], 1
    %419 = vsyncpa [#allocation9], 1
    %420 = vsyncpa [#allocation12], 1
    %421 = vsyncpa [#allocation4], 1

</llo_original>
